<compile_context>
chip_gen: v7x
topology: tpu7x:2x2x1
jax: 0.10.0
libtpu: 0.0.40
codegen_flags: <defaults>
</compile_context>

<pallas_src>
import numpy as np
import jax
import jax.numpy as jnp
from jax.experimental import pallas as pl
from jax.experimental.pallas import tpu as pltpu

FEATURE_DIM = 44
HIDDEN_DIMS = [128, 64, 32]
T_EMBED_DIM = HIDDEN_DIMS[0] - FEATURE_DIM      # 84
HALF_EMBED = T_EMBED_DIM // 2                   # 42
OUT_DIM = 4
SIGMA = 25.0
MAX_TILE_N = 2048      # keeps per-step VMEM well under v5e's 16 MiB scoped default
MIN_GRID_STEPS = 4     # >= 2 grid steps per TensorCore on v7x


def _silu(x):
    return x * jax.nn.sigmoid(x)


def _round_up(x, m):
    return ((x + m - 1) // m) * m


def _choose_tile(n_nodes):
    n8 = _round_up(max(int(n_nodes), 1), 8)
    # Aim for >= MIN_GRID_STEPS grid steps so both v7x TensorCores can
    # double-buffer their own DMA; cap the tile for v5e scoped-VMEM headroom.
    tile = _round_up(-(-n8 // MIN_GRID_STEPS), 8)
    if tile >= 256:
        tile = _round_up(tile, 256)   # pack full 256-row MXU M-tiles (v6e/v7x)
    return int(max(8, min(MAX_TILE_N, tile)))


# ----------------------------------------------------------------------------
# Pallas kernel: fused 3-layer SiLU MLP per node (natural weight shapes)
# ----------------------------------------------------------------------------
def scorenet_mlp_kernel(x_ref, e_ref, w1_ref, w2_ref, b2_ref, w3_ref, b3_ref,
                        o_ref):
    # x_ref: (TN, 44) node_attr tile
    # e_ref: (TN, 64) per-node layer-1 partial: embed[g] @ W1[44:, :] + b1
    h = jnp.dot(x_ref[...], w1_ref[...], preferred_element_type=jnp.float32)
    h = _silu(h + e_ref[...])                                                # (TN, 64)
    h = _silu(jnp.dot(h, w2_ref[...], preferred_element_type=jnp.float32)
              + b2_ref[...])                                                 # (TN, 32)
    h = _silu(jnp.dot(h, w3_ref[...], preferred_element_type=jnp.float32)
              + b3_ref[...])                                                 # (TN, 4)
    o_ref[...] = h


# ----------------------------------------------------------------------------
# Parameters
# ----------------------------------------------------------------------------
def init_params(key):
    ks = jax.random.split(key, 9)
    f32 = jnp.float32
    p = {}
    # GaussianFourierProjection weights (non-trainable in torch): randn * 30
    p["W_gfp"] = (jax.random.normal(ks[0], (HALF_EMBED,)) * 30.0).astype(f32)
    # Linear(84, 84) of the time-embedding head
    p["we"] = (jax.random.normal(ks[1], (T_EMBED_DIM, T_EMBED_DIM)) * 0.1).astype(f32)
    p["be"] = (jax.random.normal(ks[2], (T_EMBED_DIM,)) * 0.1).astype(f32)
    # Linear(128, 64) / Linear(64, 32) / Linear(32, 4)
    p["w1"] = (jax.random.normal(ks[3], (HIDDEN_DIMS[0], HIDDEN_DIMS[1])) * 0.1).astype(f32)
    p["b1"] = (jax.random.normal(ks[4], (HIDDEN_DIMS[1],)) * 0.1).astype(f32)
    p["w2"] = (jax.random.normal(ks[5], (HIDDEN_DIMS[1], HIDDEN_DIMS[2])) * 0.1).astype(f32)
    p["b2"] = (jax.random.normal(ks[6], (HIDDEN_DIMS[2],)) * 0.1).astype(f32)
    p["w3"] = (jax.random.normal(ks[7], (HIDDEN_DIMS[2], OUT_DIM)) * 0.1).astype(f32)
    p["b3"] = (jax.random.normal(ks[8], (OUT_DIM,)) * 0.1).astype(f32)
    return p


# ----------------------------------------------------------------------------
# Forward
# ----------------------------------------------------------------------------
def scorenet_forward(node_attr, t, ptr, params, sigma=SIGMA):
    """node_attr: (n_nodes, 44); t: (n_graphs,); ptr: (n_graphs+1,) CSR offsets."""
    n_nodes = int(node_attr.shape[0])
    n_graphs = int(t.shape[0])
    counts = ptr[1:] - ptr[:-1]
    gid = jnp.repeat(jnp.arange(n_graphs), counts, total_repeat_length=n_nodes)

    t = t.astype(jnp.float32)

    # --- per-graph (tiny) computations, hoisted out of the per-node kernel ---
    x_proj = t[:, None] * params["W_gfp"][None, :] * (2.0 * np.pi)           # (G, 42)
    gfp = jnp.concatenate([jnp.sin(x_proj), jnp.cos(x_proj)], axis=-1)       # (G, 84)
    embed = _silu(gfp @ params["we"] + params["be"])                         # (G, 84)
    # layer-1 contribution of the time embedding, per graph (includes b1)
    embed_l1 = embed @ params["w1"][FEATURE_DIM:, :] + params["b1"]          # (G, 64)
    std = jnp.sqrt((sigma ** (2.0 * t) - 1.0) / (2.0 * np.log(sigma)))       # (G,)
    inv_std = 1.0 / std

    # --- per-node kernel inputs (no (N,128) concat materialized in HBM) ---
    x_node = node_attr.astype(jnp.float32)                                   # (N, 44)
    e_node = embed_l1[gid].astype(jnp.float32)                               # (N, 64)
    # TODO(synk): the (N,64) per-node gather above is still materialized by
    # XLA before the pallas_call; fusing it into the kernel input DMA would
    # remove that extra HBM pass.

    tile = _choose_tile(n_nodes)
    padded = _round_up(n_nodes, tile)
    pad = padded - n_nodes
    x_p = jnp.pad(x_node, ((0, pad), (0, 0)))
    e_p = jnp.pad(e_node, ((0, pad), (0, 0)))

    w1a = params["w1"][:FEATURE_DIM, :]             # (44, 64)
    w2 = params["w2"]                               # (64, 32)
    b2 = params["b2"].reshape(1, -1)                # (1, 32)
    w3 = params["w3"]                               # (32, 4)
    b3 = params["b3"].reshape(1, -1)                # (1, 4)

    h1, h2 = HIDDEN_DIMS[1], HIDDEN_DIMS[2]
    grid = (padded // tile,)

    out = pl.pallas_call(
        scorenet_mlp_kernel,
        out_shape=jax.ShapeDtypeStruct((padded, OUT_DIM), jnp.float32),
        grid=grid,
        in_specs=[
            pl.BlockSpec((tile, FEATURE_DIM), lambda i: (i, 0)),   # node_attr tile
            pl.BlockSpec((tile, h1), lambda i: (i, 0)),            # layer-1 embed part
            pl.BlockSpec((FEATURE_DIM, h1), lambda i: (0, 0)),     # W1[:44, :]
            pl.BlockSpec((h1, h2), lambda i: (0, 0)),              # W2
            pl.BlockSpec((1, h2), lambda i: (0, 0)),               # b2
            pl.BlockSpec((h2, OUT_DIM), lambda i: (0, 0)),         # W3
            pl.BlockSpec((1, OUT_DIM), lambda i: (0, 0)),          # b3
        ],
        out_specs=pl.BlockSpec((tile, OUT_DIM), lambda i: (i, 0)),
        compiler_params=pltpu.CompilerParams(
            dimension_semantics=("parallel",)),
    )(x_p, e_p, w1a, w2, b2, w3, b3)

    # 1/std applied here (XLA fuses it with the slice); no lane-padded (tile,1)
    # stream inside the kernel.
    return out[:n_nodes] * inv_std[gid][:, None]


# ----------------------------------------------------------------------------
# Pure-JAX reference mirroring the PyTorch forward exactly
# ----------------------------------------------------------------------------
def scorenet_reference(node_attr, t, ptr, params, sigma=SIGMA):
    x_proj = t[:, None] * params["W_gfp"][None, :] * 2.0 * np.pi
    gfp = jnp.concatenate([jnp.sin(x_proj), jnp.cos(x_proj)], axis=-1)
    embed = _silu(gfp @ params["we"] + params["be"])
    counts = ptr[1:] - ptr[:-1]
    gid = jnp.repeat(jnp.arange(counts.shape[0]), counts,
                     total_repeat_length=node_attr.shape[0])
    h = jnp.concatenate([node_attr, embed[gid]], axis=-1)
    h = _silu(h @ params["w1"] + params["b1"])
    h = _silu(h @ params["w2"] + params["b2"])
    h = _silu(h @ params["w3"] + params["b3"])
    std = jnp.sqrt((sigma ** (2.0 * t) - 1.0) / 2.0 / np.log(sigma))
    return h / std[gid][:, None]


if __name__ == "__main__":
    key = jax.random.PRNGKey(0)
    k_param, k_x, k_t = jax.random.split(key, 3)

    params = init_params(k_param)

    # small synthetic graph batch: 3 graphs with 5, 4, 3 nodes (12 total)
    ptr = jnp.array([0, 5, 9, 12], dtype=jnp.int32)
    n_nodes = 12
    node_attr = jax.random.normal(k_x, (n_nodes, FEATURE_DIM), dtype=jnp.float32)
    t = jax.random.uniform(k_t, (3,), minval=1e-3, maxval=1.0, dtype=jnp.float32)

    out = scorenet_forward(node_attr, t, ptr, params)
    out = jax.block_until_ready(out)

    ref = scorenet_reference(node_attr, t, ptr, params)
    assert out.shape == (n_nodes, OUT_DIM)
    np.testing.assert_allclose(np.asarray(out), np.asarray(ref), rtol=1e-4, atol=1e-4)

    print("KERNEL_OK")
</pallas_src>

<mosaic_0001>
module attributes {stable_mosaic.version = 11 : i64} {
  func.func @scorenet_mlp_kernel(%arg0: i32, %arg1: memref<8x44xf32, #tpu.memory_space<vmem>>, %arg2: memref<8x64xf32, #tpu.memory_space<vmem>>, %arg3: memref<44x64xf32, #tpu.memory_space<vmem>>, %arg4: memref<64x32xf32, #tpu.memory_space<vmem>>, %arg5: memref<1x32xf32, #tpu.memory_space<vmem>>, %arg6: memref<32x4xf32, #tpu.memory_space<vmem>>, %arg7: memref<1x4xf32, #tpu.memory_space<vmem>>, %arg8: memref<8x4xf32, #tpu.memory_space<vmem>>) attributes {dimension_semantics = [#tpu.dimension_semantics<parallel>], iteration_bounds = array<i64: 2>, scalar_prefetch = 0 : i64, scratch_operands = 0 : i64, tpu.core_type = #tpu.core_type<tc>, window_params = [{transform_indices = @transform_0, window_bounds = array<i64: 8, 44>}, {transform_indices = @transform_1, window_bounds = array<i64: 8, 64>}, {pipeline_mode = #tpu.pipeline_mode<synchronous>, transform_indices = @transform_2, window_bounds = array<i64: 44, 64>}, {pipeline_mode = #tpu.pipeline_mode<synchronous>, transform_indices = @transform_3, window_bounds = array<i64: 64, 32>}, {pipeline_mode = #tpu.pipeline_mode<synchronous>, transform_indices = @transform_4, window_bounds = array<i64: 1, 32>}, {pipeline_mode = #tpu.pipeline_mode<synchronous>, transform_indices = @transform_5, window_bounds = array<i64: 32, 4>}, {pipeline_mode = #tpu.pipeline_mode<synchronous>, transform_indices = @transform_6, window_bounds = array<i64: 1, 4>}, {transform_indices = @transform_7, window_bounds = array<i64: 8, 4>}]} {
    %c0 = arith.constant 0 : index
    %c0_0 = arith.constant 0 : index
    %0 = vector.load %arg1[%c0, %c0_0] : memref<8x44xf32, #tpu.memory_space<vmem>>, vector<8x44xf32>
    %c0_1 = arith.constant 0 : index
    %c0_2 = arith.constant 0 : index
    %1 = vector.load %arg3[%c0_1, %c0_2] : memref<44x64xf32, #tpu.memory_space<vmem>>, vector<44x64xf32>
    %cst = arith.constant dense<0.000000e+00> : vector<8x64xf32>
    %2 = tpu.matmul %0, %1, %cst {dimension_numbers = #tpu.dot_dimension_numbers<[1], [0], [0], [1], [0, 0, 1, 1], [], []>} : vector<8x44xf32>, vector<44x64xf32>, vector<8x64xf32> -> vector<8x64xf32>
    %c0_3 = arith.constant 0 : index
    %c0_4 = arith.constant 0 : index
    %3 = vector.load %arg2[%c0_3, %c0_4] : memref<8x64xf32, #tpu.memory_space<vmem>>, vector<8x64xf32>
    %4 = arith.addf %2, %3 : vector<8x64xf32>
    %5 = arith.negf %4 : vector<8x64xf32>
    %6 = math.exp %5 : vector<8x64xf32>
    %cst_5 = arith.constant 1.000000e+00 : f32
    %7 = vector.broadcast %cst_5 : f32 to vector<8x64xf32>
    %8 = arith.addf %7, %6 : vector<8x64xf32>
    %9 = arith.divf %7, %8 : vector<8x64xf32>
    %10 = arith.mulf %4, %9 : vector<8x64xf32>
    %c0_6 = arith.constant 0 : index
    %c0_7 = arith.constant 0 : index
    %11 = vector.load %arg4[%c0_6, %c0_7] : memref<64x32xf32, #tpu.memory_space<vmem>>, vector<64x32xf32>
    %cst_8 = arith.constant dense<0.000000e+00> : vector<8x32xf32>
    %12 = tpu.matmul %10, %11, %cst_8 {dimension_numbers = #tpu.dot_dimension_numbers<[1], [0], [0], [1], [0, 0, 1, 1], [], []>} : vector<8x64xf32>, vector<64x32xf32>, vector<8x32xf32> -> vector<8x32xf32>
    %c0_9 = arith.constant 0 : index
    %c0_10 = arith.constant 0 : index
    %13 = vector.load %arg5[%c0_9, %c0_10] : memref<1x32xf32, #tpu.memory_space<vmem>>, vector<1x32xf32>
    %14 = vector.broadcast %13 : vector<1x32xf32> to vector<8x32xf32>
    %15 = arith.addf %12, %14 : vector<8x32xf32>
    %16 = arith.negf %15 : vector<8x32xf32>
    %17 = math.exp %16 : vector<8x32xf32>
    %cst_11 = arith.constant 1.000000e+00 : f32
    %18 = vector.broadcast %cst_11 : f32 to vector<8x32xf32>
    %19 = arith.addf %18, %17 : vector<8x32xf32>
    %20 = arith.divf %18, %19 : vector<8x32xf32>
    %21 = arith.mulf %15, %20 : vector<8x32xf32>
    %c0_12 = arith.constant 0 : index
    %c0_13 = arith.constant 0 : index
    %22 = vector.load %arg6[%c0_12, %c0_13] : memref<32x4xf32, #tpu.memory_space<vmem>>, vector<32x4xf32>
    %cst_14 = arith.constant dense<0.000000e+00> : vector<8x4xf32>
    %23 = tpu.matmul %21, %22, %cst_14 {dimension_numbers = #tpu.dot_dimension_numbers<[1], [0], [0], [1], [0, 0, 1, 1], [], []>} : vector<8x32xf32>, vector<32x4xf32>, vector<8x4xf32> -> vector<8x4xf32>
    %c0_15 = arith.constant 0 : index
    %c0_16 = arith.constant 0 : index
    %24 = vector.load %arg7[%c0_15, %c0_16] : memref<1x4xf32, #tpu.memory_space<vmem>>, vector<1x4xf32>
    %25 = vector.broadcast %24 : vector<1x4xf32> to vector<8x4xf32>
    %26 = arith.addf %23, %25 : vector<8x4xf32>
    %27 = arith.negf %26 : vector<8x4xf32>
    %28 = math.exp %27 : vector<8x4xf32>
    %cst_17 = arith.constant 1.000000e+00 : f32
    %29 = vector.broadcast %cst_17 : f32 to vector<8x4xf32>
    %30 = arith.addf %29, %28 : vector<8x4xf32>
    %31 = arith.divf %29, %30 : vector<8x4xf32>
    %32 = arith.mulf %26, %31 : vector<8x4xf32>
    %c0_18 = arith.constant 0 : index
    %c0_19 = arith.constant 0 : index
    %33 = vector.load %arg8[%c0_18, %c0_19] : memref<8x4xf32, #tpu.memory_space<vmem>>, vector<8x4xf32>
    tpu.vector_store %arg8[%c0_18, %c0_19], %32 {strides = array<i32>} : memref<8x4xf32, #tpu.memory_space<vmem>>, vector<8x4xf32>,
    return
  }
  func.func @transform_0(%arg0: i32) -> (i32, i32) {
    %c0_i32 = arith.constant 0 : i32
    %c0_i32_0 = arith.constant 0 : i32
    return %arg0, %c0_i32 : i32, i32
  }
  func.func @transform_1(%arg0: i32) -> (i32, i32) {
    %c0_i32 = arith.constant 0 : i32
    %c0_i32_0 = arith.constant 0 : i32
    return %arg0, %c0_i32 : i32, i32
  }
  func.func @transform_2(%arg0: i32) -> (i32, i32) {
    %c0_i32 = arith.constant 0 : i32
    %c0_i32_0 = arith.constant 0 : i32
    %c0_i32_1 = arith.constant 0 : i32
    return %c0_i32, %c0_i32_0 : i32, i32
  }
  func.func @transform_3(%arg0: i32) -> (i32, i32) {
    %c0_i32 = arith.constant 0 : i32
    %c0_i32_0 = arith.constant 0 : i32
    %c0_i32_1 = arith.constant 0 : i32
    return %c0_i32, %c0_i32_0 : i32, i32
  }
  func.func @transform_4(%arg0: i32) -> (i32, i32) {
    %c0_i32 = arith.constant 0 : i32
    %c0_i32_0 = arith.constant 0 : i32
    %c0_i32_1 = arith.constant 0 : i32
    return %c0_i32, %c0_i32_0 : i32, i32
  }
  func.func @transform_5(%arg0: i32) -> (i32, i32) {
    %c0_i32 = arith.constant 0 : i32
    %c0_i32_0 = arith.constant 0 : i32
    %c0_i32_1 = arith.constant 0 : i32
    return %c0_i32, %c0_i32_0 : i32, i32
  }
  func.func @transform_6(%arg0: i32) -> (i32, i32) {
    %c0_i32 = arith.constant 0 : i32
    %c0_i32_0 = arith.constant 0 : i32
    %c0_i32_1 = arith.constant 0 : i32
    return %c0_i32, %c0_i32_0 : i32, i32
  }
  func.func @transform_7(%arg0: i32) -> (i32, i32) {
    %c0_i32 = arith.constant 0 : i32
    %c0_i32_0 = arith.constant 0 : i32
    return %arg0, %c0_i32 : i32, i32
  }
}

</mosaic_0001>

<llo_original>
// kernel: tpu_custom_call.1
$region0: #{tpu_custom_call.1}
  #allocation0 [shape = 'u32[]', space=smem, size = 0x4, offset = 0x4, fixed_abs, tag = 'smem constant byte address 0x4 - core index']
  #allocation1 [shape = 'u32[144,128]{1,0:T(1,128)}', space=vmem, size = 0x12000, scoped, tag = 'internal scratch']
  %s0 = inlined_call_operand.vmem [shape: f32[16,44], index: 0, kind: input, shape index: {}]
  %s1 = inlined_call_operand.vmem [shape: f32[16,64], index: 1, kind: input, shape index: {}]
  %s2 = inlined_call_operand.vmem [shape: f32[44,64], index: 2, kind: input, shape index: {}]
  %s3 = inlined_call_operand.vmem [shape: f32[64,32], index: 3, kind: input, shape index: {}]
  %s4 = inlined_call_operand.vmem [shape: f32[1,32], index: 4, kind: input, shape index: {}]
  %s5 = inlined_call_operand.vmem [shape: f32[32,4], index: 5, kind: input, shape index: {}]
  %s6 = inlined_call_operand.vmem [shape: f32[1,4], index: 6, kind: input, shape index: {}]
  %s7 = inlined_call_operand.vmem [shape: f32[16,4], index: 7, kind: output, shape index: {}]
  %s8 = sld [smem:[#allocation0]]
  $region61: #{tpu_custom_call.1} parent=0
    _
  %s10 = ssub.s32 1, %s8
  %s11 = scalar_select 0, %s10, %s8
  loop: start=0, step=1, limit=4
  $region2: #{tpu_custom_call.1} parent=0 // loop_pre_header
    _
  $region3: #{tpu_custom_call.1} parent=0 // loop_header
    %s13 = sphi 0, %s17
    %p14 = scmp.ge.s32.totalorder %s13, 4
    %s23 = sphi 0, %s25
    %s26 = sphi 0, %s23
    %s27 = sphi 0, %s26
    %s43 = sphi 0, %s27
    %s49 = sphi 0, %s51
    %s52 = sphi 0, %s49
    %s53 = sphi 0, %s52
    %s69 = sphi 0, %s53
    %s73 = sphi 0, %s73
    %s75 = sphi 0, %s73
    %s76 = sphi 0, %s75
    %s90 = sphi 0, %s76
    %s94 = sphi 0, %s94
    %s96 = sphi 0, %s94
    %s97 = sphi 0, %s96
    %s111 = sphi 0, %s97
    %s115 = sphi 0, %s115
    %s117 = sphi 0, %s115
    %s118 = sphi 0, %s117
    %s132 = sphi 0, %s118
    %s136 = sphi 0, %s136
    %s138 = sphi 0, %s136
    %s139 = sphi 0, %s138
    %s153 = sphi 0, %s139
    %s157 = sphi 0, %s157
    %s159 = sphi 0, %s157
    %s160 = sphi 0, %s159
    %s174 = sphi 0, %s160
    %s180 = sphi 0, %s182
    %s183 = sphi 0, %s180
    %s184 = sphi 0, %s183
    %s200 = sphi 0, %s184
  $region4: #{tpu_custom_call.1} parent=0 // loop_header_branch
    %16 = sbr.rel (%p14) target = $region8
  $region5: #{tpu_custom_call.1} parent=0 // loop_body
    %s18 = ssub.s32 %s13, 1
    %s19 = ssub.s32 %s13, 2
    %s20 = sadd.s32 %s13, 1
    %s21 = ssub.s32 %s13, %s20
    %p22 = scmp.eq.s32.totalorder %s21, 0
    %s24 = sadd.s32 %s23, 1
    %s25 = scalar_select %p22, %s23, %s24
    %p28 = pneg %p22
    %p29 = scmp.eq.s32.totalorder %s13, 1
    %p30 = por %p28, %p29
    %p31 = scmp.ne.s32.totalorder %s23, %s26
    %p32 = scmp.eq.s32.totalorder %s13, 0
    %p33 = por %p31, %p32
    %p34 = scmp.ne.s32.totalorder %s23, %s26
    %p35 = scmp.eq.s32.totalorder %s18, 1
    %p36 = por %p34, %p35
    %p37 = scmp.ne.s32.totalorder %s26, %s27
    %p38 = scmp.eq.s32.totalorder %s18, 0
    %p39 = por %p37, %p38
    %p40 = scmp.ne.s32.totalorder %s26, %s27
    %p41 = scmp.eq.s32.totalorder %s19, 1
    %p42 = por %p40, %p41
    %p44 = scmp.ne.s32.totalorder %s27, %s43
    %p45 = scmp.eq.s32.totalorder %s19, 0
    %p46 = por %p44, %p45
    %s47 = ssub.s32 %s13, %s20
    %p48 = scmp.eq.s32.totalorder %s47, 0
    %s50 = sadd.s32 %s49, 1
    %s51 = scalar_select %p48, %s49, %s50
    %p54 = pneg %p48
    %p55 = scmp.eq.s32.totalorder %s13, 1
    %p56 = por %p54, %p55
    %p57 = scmp.ne.s32.totalorder %s49, %s52
    %p58 = scmp.eq.s32.totalorder %s13, 0
    %p59 = por %p57, %p58
    %p60 = scmp.ne.s32.totalorder %s49, %s52
    %p61 = scmp.eq.s32.totalorder %s18, 1
    %p62 = por %p60, %p61
    %p63 = scmp.ne.s32.totalorder %s52, %s53
    %p64 = scmp.eq.s32.totalorder %s18, 0
    %p65 = por %p63, %p64
    %p66 = scmp.ne.s32.totalorder %s52, %s53
    %p67 = scmp.eq.s32.totalorder %s19, 1
    %p68 = por %p66, %p67
    %p70 = scmp.ne.s32.totalorder %s53, %s69
    %p71 = scmp.eq.s32.totalorder %s19, 0
    %p72 = por %p70, %p71
    %s74 = sadd.s32 %s73, 1
    %p77 = scmp.eq.s32.totalorder %s13, 1
    %p78 = scmp.ne.s32.totalorder %s73, %s75
    %p79 = scmp.eq.s32.totalorder %s13, 0
    %p80 = por %p78, %p79
    %p81 = scmp.ne.s32.totalorder %s73, %s75
    %p82 = scmp.eq.s32.totalorder %s18, 1
    %p83 = por %p81, %p82
    %p84 = scmp.ne.s32.totalorder %s75, %s76
    %p85 = scmp.eq.s32.totalorder %s18, 0
    %p86 = por %p84, %p85
    %p87 = scmp.ne.s32.totalorder %s75, %s76
    %p88 = scmp.eq.s32.totalorder %s19, 1
    %p89 = por %p87, %p88
    %p91 = scmp.ne.s32.totalorder %s76, %s90
    %p92 = scmp.eq.s32.totalorder %s19, 0
    %p93 = por %p91, %p92
    %s95 = sadd.s32 %s94, 1
    %p98 = scmp.eq.s32.totalorder %s13, 1
    %p99 = scmp.ne.s32.totalorder %s94, %s96
    %p100 = scmp.eq.s32.totalorder %s13, 0
    %p101 = por %p99, %p100
    %p102 = scmp.ne.s32.totalorder %s94, %s96
    %p103 = scmp.eq.s32.totalorder %s18, 1
    %p104 = por %p102, %p103
    %p105 = scmp.ne.s32.totalorder %s96, %s97
    %p106 = scmp.eq.s32.totalorder %s18, 0
    %p107 = por %p105, %p106
    %p108 = scmp.ne.s32.totalorder %s96, %s97
    %p109 = scmp.eq.s32.totalorder %s19, 1
    %p110 = por %p108, %p109
    %p112 = scmp.ne.s32.totalorder %s97, %s111
    %p113 = scmp.eq.s32.totalorder %s19, 0
    %p114 = por %p112, %p113
    %s116 = sadd.s32 %s115, 1
    %p119 = scmp.eq.s32.totalorder %s13, 1
    %p120 = scmp.ne.s32.totalorder %s115, %s117
    %p121 = scmp.eq.s32.totalorder %s13, 0
    %p122 = por %p120, %p121
    %p123 = scmp.ne.s32.totalorder %s115, %s117
    %p124 = scmp.eq.s32.totalorder %s18, 1
    %p125 = por %p123, %p124
    %p126 = scmp.ne.s32.totalorder %s117, %s118
    %p127 = scmp.eq.s32.totalorder %s18, 0
    %p128 = por %p126, %p127
    %p129 = scmp.ne.s32.totalorder %s117, %s118
    %p130 = scmp.eq.s32.totalorder %s19, 1
    %p131 = por %p129, %p130
    %p133 = scmp.ne.s32.totalorder %s118, %s132
    %p134 = scmp.eq.s32.totalorder %s19, 0
    %p135 = por %p133, %p134
    %s137 = sadd.s32 %s136, 1
    %p140 = scmp.eq.s32.totalorder %s13, 1
    %p141 = scmp.ne.s32.totalorder %s136, %s138
    %p142 = scmp.eq.s32.totalorder %s13, 0
    %p143 = por %p141, %p142
    %p144 = scmp.ne.s32.totalorder %s136, %s138
    %p145 = scmp.eq.s32.totalorder %s18, 1
    %p146 = por %p144, %p145
    %p147 = scmp.ne.s32.totalorder %s138, %s139
    %p148 = scmp.eq.s32.totalorder %s18, 0
    %p149 = por %p147, %p148
    %p150 = scmp.ne.s32.totalorder %s138, %s139
    %p151 = scmp.eq.s32.totalorder %s19, 1
    %p152 = por %p150, %p151
    %p154 = scmp.ne.s32.totalorder %s139, %s153
    %p155 = scmp.eq.s32.totalorder %s19, 0
    %p156 = por %p154, %p155
    %s158 = sadd.s32 %s157, 1
    %p161 = scmp.eq.s32.totalorder %s13, 1
    %p162 = scmp.ne.s32.totalorder %s157, %s159
    %p163 = scmp.eq.s32.totalorder %s13, 0
    %p164 = por %p162, %p163
    %p165 = scmp.ne.s32.totalorder %s157, %s159
    %p166 = scmp.eq.s32.totalorder %s18, 1
    %p167 = por %p165, %p166
    %p168 = scmp.ne.s32.totalorder %s159, %s160
    %p169 = scmp.eq.s32.totalorder %s18, 0
    %p170 = por %p168, %p169
    %p171 = scmp.ne.s32.totalorder %s159, %s160
    %p172 = scmp.eq.s32.totalorder %s19, 1
    %p173 = por %p171, %p172
    %p175 = scmp.ne.s32.totalorder %s160, %s174
    %p176 = scmp.eq.s32.totalorder %s19, 0
    %p177 = por %p175, %p176
    %s178 = ssub.s32 %s13, %s20
    %p179 = scmp.eq.s32.totalorder %s178, 0
    %s181 = sadd.s32 %s180, 1
    %s182 = scalar_select %p179, %s180, %s181
    %p185 = pneg %p179
    %p186 = scmp.eq.s32.totalorder %s13, 1
    %p187 = por %p185, %p186
    %p188 = scmp.ne.s32.totalorder %s180, %s183
    %p189 = scmp.eq.s32.totalorder %s13, 0
    %p190 = por %p188, %p189
    %p191 = scmp.ne.s32.totalorder %s180, %s183
    %p192 = scmp.eq.s32.totalorder %s18, 1
    %p193 = por %p191, %p192
    %p194 = scmp.ne.s32.totalorder %s183, %s184
    %p195 = scmp.eq.s32.totalorder %s18, 0
    %p196 = por %p194, %p195
    %p197 = scmp.ne.s32.totalorder %s183, %s184
    %p198 = scmp.eq.s32.totalorder %s19, 1
    %p199 = por %p197, %p198
    %p201 = scmp.ne.s32.totalorder %s184, %s200
    %p202 = scmp.eq.s32.totalorder %s19, 0
    %p203 = por %p201, %p202
    %p204 = scmp.le.s32.totalorder 1, %s13
    %p205 = scmp.lt.s32.totalorder %s13, 3
    %p206 = pnand %p204, %p205
    %p207 = pneg %p206
    // Predicated region
    $region9: #{tpu_custom_call.1} parent=5 // pred_check
      _
    $region10: #{tpu_custom_call.1} parent=5 // pred_check_branch
      %209 = sbr.rel (%p206) target = $region12
    $region11: #{tpu_custom_call.1} parent=5 // pred_region
      %s210 = ssub.s32 %s13, 1
      // Predicated region
      $region13: #{tpu_custom_call.1} parent=11 // pred_check
        %p211 = pneg %p86
      $region14: #{tpu_custom_call.1} parent=11 // pred_check_branch
        %213 = sbr.rel (%p211) target = $region16
      $region15: #{tpu_custom_call.1} parent=11 // pred_region
        _
      $region16: #{tpu_custom_call.1} parent=11 // pred_fallthru
        _
      // Predicated region
      $region17: #{tpu_custom_call.1} parent=11 // pred_check
        %p214 = pneg %p107
      $region18: #{tpu_custom_call.1} parent=11 // pred_check_branch
        %216 = sbr.rel (%p214) target = $region20
      $region19: #{tpu_custom_call.1} parent=11 // pred_region
        _
      $region20: #{tpu_custom_call.1} parent=11 // pred_fallthru
        _
      // Predicated region
      $region21: #{tpu_custom_call.1} parent=11 // pred_check
        %p217 = pneg %p128
      $region22: #{tpu_custom_call.1} parent=11 // pred_check_branch
        %219 = sbr.rel (%p217) target = $region24
      $region23: #{tpu_custom_call.1} parent=11 // pred_region
        _
      $region24: #{tpu_custom_call.1} parent=11 // pred_fallthru
        _
      // Predicated region
      $region25: #{tpu_custom_call.1} parent=11 // pred_check
        %p220 = pneg %p149
      $region26: #{tpu_custom_call.1} parent=11 // pred_check_branch
        %222 = sbr.rel (%p220) target = $region28
      $region27: #{tpu_custom_call.1} parent=11 // pred_region
        _
      $region28: #{tpu_custom_call.1} parent=11 // pred_fallthru
        _
      // Predicated region
      $region29: #{tpu_custom_call.1} parent=11 // pred_check
        %p223 = pneg %p170
      $region30: #{tpu_custom_call.1} parent=11 // pred_check_branch
        %225 = sbr.rel (%p223) target = $region32
      $region31: #{tpu_custom_call.1} parent=11 // pred_region
        _
      $region32: #{tpu_custom_call.1} parent=11 // pred_fallthru
        _
    $region12: #{tpu_custom_call.1} parent=5 // pred_fallthru
      _
    %p226 = scmp.lt.s32.totalorder %s13, 2
    // Predicated region
    $region33: #{tpu_custom_call.1} parent=5 // pred_check
      %p227 = pneg %p226
    $region34: #{tpu_custom_call.1} parent=5 // pred_check_branch
      %229 = sbr.rel (%p227) target = $region36
    $region35: #{tpu_custom_call.1} parent=5 // pred_region
      // Predicated region
      $region37: #{tpu_custom_call.1} parent=35 // pred_check
        %p230 = pneg %p33
      $region38: #{tpu_custom_call.1} parent=35 // pred_check_branch
        %232 = sbr.rel (%p230) target = $region40
      $region39: #{tpu_custom_call.1} parent=35 // pred_region
        %p233 = scmp.lt.s32.totalorder %s13, 1
        %s234 = scalar_select %p233, %s13, 1
        %s235 = smul.addr %s234, 8
        %s236 = scalar_lea.vmem %s0, %s235
      $region40: #{tpu_custom_call.1} parent=35 // pred_fallthru
        _
      // Predicated region
      $region41: #{tpu_custom_call.1} parent=35 // pred_check
        %p237 = pneg %p59
      $region42: #{tpu_custom_call.1} parent=35 // pred_check_branch
        %239 = sbr.rel (%p237) target = $region44
      $region43: #{tpu_custom_call.1} parent=35 // pred_region
        %p240 = scmp.lt.s32.totalorder %s13, 1
        %s241 = scalar_select %p240, %s13, 1
        %s242 = smul.addr %s241, 8
        %s243 = scalar_lea.vmem %s1, %s242
      $region44: #{tpu_custom_call.1} parent=35 // pred_fallthru
        _
    $region36: #{tpu_custom_call.1} parent=5 // pred_fallthru
      _
    %p244 = scmp.le.s32.totalorder 1, %s13
    %p245 = scmp.lt.s32.totalorder %s13, 3
    %p246 = pnand %p244, %p245
    %p247 = pneg %p246
    // Predicated region
    $region45: #{tpu_custom_call.1} parent=5 // pred_check
      _
    $region46: #{tpu_custom_call.1} parent=5 // pred_check_branch
      %249 = sbr.rel (%p246) target = $region48
    $region47: #{tpu_custom_call.1} parent=5 // pred_region
      %s250 = ssub.s32 %s13, 1
      %p251 = scmp.lt.s32.totalorder %s18, 1
      %s252 = scalar_select %p251, %s18, 1
      %s253 = smul.addr %s252, 8
      %s254 = scalar_lea.vmem %s0, %s253
      %p255 = pneg %p39
      %p256 = pneg %p36
      %p257 = scmp.lt.s32.totalorder %s18, 1
      %s258 = scalar_select %p257, %s18, 1
      %s259 = smul.addr %s258, 8
      %s260 = scalar_lea.vmem %s1, %s259
      %p261 = pneg %p65
      %p262 = pneg %p62
      %p263 = pneg %p86
      %p264 = pneg %p83
      %p265 = pneg %p107
      %p266 = pneg %p104
      %p267 = pneg %p128
      %p268 = pneg %p125
      %p269 = pneg %p149
      %p270 = pneg %p146
      %p271 = pneg %p170
      %p272 = pneg %p167
      %p273 = pneg %p196
      %p274 = pneg %p193
      %p275 = scmp.lt.s32.totalorder %s18, 1
      %s276 = scalar_select %p275, %s18, 1
      %s277 = smul.addr %s276, 8
      %s278 = scalar_lea.vmem %s7, %s277
      %p279 = scmp.lt.s32.totalorder %s18, 1
      %s280 = scalar_select %p279, %s18, 1
      %s281 = smul.addr %s280, 8
      %s282 = scalar_lea.vmem %s0, %s281
      %p283 = scmp.lt.s32.totalorder %s18, 1
      %s284 = scalar_select %p283, %s18, 1
      %s285 = smul.addr %s284, 8
      %s286 = scalar_lea.vmem %s1, %s285
      %p287 = scmp.lt.s32.totalorder %s18, 1
      %s288 = scalar_select %p287, %s18, 1
      %s289 = smul.addr %s288, 8
      %s290 = scalar_lea.vmem %s7, %s289
      %v291 = vld [vmem:[%s282] sm:$0xff]
      %v292 = vld [vmem:[%s2] sm:$0xff]
      %v293 = vld [vmem:[%s2 + $0x8] sm:$0xff]
      %v294 = vld [vmem:[%s2 + $0x10] sm:$0xff]
      %v295 = vld [vmem:[%s2 + $0x18] sm:$0xff]
      %v296 = vld [vmem:[%s2 + $0x20] sm:$0xff]
      %v297 = vld [vmem:[%s2 + $0x28] sm:$0xf]
      %v298 = vld [vmem:[%s286] sm:$0xff]
      %vm299 = vcmask 359424
      %v301 = vsel %vm299, %v291, 0
      %vm303 = vcmask 1043456
      %v305 = vsel %vm303, %v297, 0
      %307 = vmatprep.subr.mxu0 0.0
      %308 = vmatpush1.msra.mxu0 %v292
      %309 = vmatprep.subr.mxu0 0.0
      %310 = vmatpush1.msra.mxu0 %v293
      %311 = vmatprep.subr.mxu0 0.0
      %312 = vmatpush1.msra.mxu0 %v294
      %313 = vmatprep.subr.mxu0 0.0
      %314 = vmatpush1.msra.mxu0 %v295
      %315 = vmatprep.subr.mxu0 0.0
      %316 = vmatpush1.msra.mxu0 %v296
      %317 = vmatprep.subr.mxu0 0.0
      %318 = vmatpush1.msra.mxu0 %v305
      %319 = vmatprep.subr.mxu0 0.0
      %320 = vmatpush1.msra.mxu0 0.0
      %321 = vmatprep.subr.mxu0 0.0
      %322 = vmatpush1.msra.mxu0 0.0
      %323 = vmatprep.subr.mxu0 0.0
      %324 = vmatpush1.msra.mxu0 0.0
      %325 = vmatprep.subr.mxu0 0.0
      %326 = vmatpush1.msra.mxu0 0.0
      %327 = vmatprep.subr.mxu0 0.0
      %328 = vmatpush1.msra.mxu0 0.0
      %329 = vmatprep.subr.mxu0 0.0
      %330 = vmatpush1.msra.mxu0 0.0
      %331 = vmatprep.subr.mxu0 0.0
      %332 = vmatpush1.msra.mxu0 0.0
      %333 = vmatprep.subr.mxu0 0.0
      %334 = vmatpush1.msra.mxu0 0.0
      %335 = vmatprep.subr.mxu0 0.0
      %336 = vmatpush1.msra.mxu0 0.0
      %337 = vmatprep.subr.mxu0 0.0
      %338 = vmatpush1.msra.mxu0 0.0
      %339 = vmatprep.subr.mxu0 0.0
      %340 = vmatpush1.msra.mxu0 0.0
      %341 = vmatprep.subr.mxu0 0.0
      %342 = vmatpush1.msra.mxu0 0.0
      %343 = vmatprep.subr.mxu0 0.0
      %344 = vmatpush1.msra.mxu0 0.0
      %345 = vmatprep.subr.mxu0 0.0
      %346 = vmatpush1.msra.mxu0 0.0
      %347 = vmatprep.subr.mxu0 0.0
      %348 = vmatpush1.msra.mxu0 0.0
      %349 = vmatprep.subr.mxu0 0.0
      %350 = vmatpush1.msra.mxu0 0.0
      %351 = vmatprep.subr.mxu0 0.0
      %352 = vmatpush1.msra.mxu0 0.0
      %353 = vmatprep.subr.mxu0 0.0
      %354 = vmatpush1.msra.mxu0 0.0
      %355 = vmatprep.subr.mxu0 0.0
      %356 = vmatpush1.msra.mxu0 0.0
      %357 = vmatprep.subr.mxu0 0.0
      %358 = vmatpush1.msra.mxu0 0.0
      %359 = vmatprep.subr.mxu0 0.0
      %360 = vmatpush1.msra.mxu0 0.0
      %361 = vmatprep.subr.mxu0 0.0
      %362 = vmatpush1.msra.mxu0 0.0
      %363 = vmatprep.subr.mxu0 0.0
      %364 = vmatpush1.msra.mxu0 0.0
      %365 = vmatprep.subr.mxu0 0.0
      %366 = vmatpush1.msra.mxu0 0.0
      %367 = vmatprep.subr.mxu0 0.0
      %368 = vmatpush1.msra.mxu0 0.0
      %369 = vmatprep.subr.mxu0 0.0
      %370 = vmatpush1.msra.mxu0 0.0
      %371 = vmatprep.mubr.f32.mxu0 0.0
      %372 = vmatmul.mubr.f32.gmra.mrb[0].mxu0 %v301
      %v373 = vpop.f32.mrb[0].mxu0
      %v374 = vadd.f32 %v298, %v373
      %v375 = vpop.f32.mrb[0].mxu0
      %376 = vdwg.mxu0
      %v377 = vxor.u32 %v374, 2147483648
      %v378 = vmul.f32 %v377, 1.442695
      %v379 = vpow.pop %v378
      %v380 = vadd.f32 %v379, 1.0
      %v381 = vrcp.pop %v380
      %v382 = vmul.f32 1.0, %v381
      %v383 = vmul.f32 %v374, %v382
      %v384 = vld [vmem:[%s3] sm:$0xff]
      %v385 = vld [vmem:[%s3 + $0x8] sm:$0xff]
      %v386 = vld [vmem:[%s3 + $0x10] sm:$0xff]
      %v387 = vld [vmem:[%s3 + $0x18] sm:$0xff]
      %v388 = vld [vmem:[%s3 + $0x20] sm:$0xff]
      %v389 = vld [vmem:[%s3 + $0x28] sm:$0xff]
      %v390 = vld [vmem:[%s3 + $0x30] sm:$0xff]
      %v391 = vld [vmem:[%s3 + $0x38] sm:$0xff]
      %v392 = vld [vmem:[%s4] sm:$0x1]
      %v394 = vlaneseq
      %v395 = vshrl.u32 %v394, 7
      %v396 = vsub.s32 0, %v395
      %v397 = vrot.slane %v392, %v396
      %vm399 = vcmask 523264
      %v401 = vsel %vm399, %v383, 0
      %403 = vmatprep.subr.mxu0 0.0
      %404 = vmatpush1.msra.mxu0 %v384
      %405 = vmatprep.subr.mxu0 0.0
      %406 = vmatpush1.msra.mxu0 %v385
      %407 = vmatprep.subr.mxu0 0.0
      %408 = vmatpush1.msra.mxu0 %v386
      %409 = vmatprep.subr.mxu0 0.0
      %410 = vmatpush1.msra.mxu0 %v387
      %411 = vmatprep.subr.mxu0 0.0
      %412 = vmatpush1.msra.mxu0 %v388
      %413 = vmatprep.subr.mxu0 0.0
      %414 = vmatpush1.msra.mxu0 %v389
      %415 = vmatprep.subr.mxu0 0.0
      %416 = vmatpush1.msra.mxu0 %v390
      %417 = vmatprep.subr.mxu0 0.0
      %418 = vmatpush1.msra.mxu0 %v391
      %419 = vmatprep.subr.mxu0 0.0
      %420 = vmatpush1.msra.mxu0 0.0
      %421 = vmatprep.subr.mxu0 0.0
      %422 = vmatpush1.msra.mxu0 0.0
      %423 = vmatprep.subr.mxu0 0.0
      %424 = vmatpush1.msra.mxu0 0.0
      %425 = vmatprep.subr.mxu0 0.0
      %426 = vmatpush1.msra.mxu0 0.0
      %427 = vmatprep.subr.mxu0 0.0
      %428 = vmatpush1.msra.mxu0 0.0
      %429 = vmatprep.subr.mxu0 0.0
      %430 = vmatpush1.msra.mxu0 0.0
      %431 = vmatprep.subr.mxu0 0.0
      %432 = vmatpush1.msra.mxu0 0.0
      %433 = vmatprep.subr.mxu0 0.0
      %434 = vmatpush1.msra.mxu0 0.0
      %435 = vmatprep.subr.mxu0 0.0
      %436 = vmatpush1.msra.mxu0 0.0
      %437 = vmatprep.subr.mxu0 0.0
      %438 = vmatpush1.msra.mxu0 0.0
      %439 = vmatprep.subr.mxu0 0.0
      %440 = vmatpush1.msra.mxu0 0.0
      %441 = vmatprep.subr.mxu0 0.0
      %442 = vmatpush1.msra.mxu0 0.0
      %443 = vmatprep.subr.mxu0 0.0
      %444 = vmatpush1.msra.mxu0 0.0
      %445 = vmatprep.subr.mxu0 0.0
      %446 = vmatpush1.msra.mxu0 0.0
      %447 = vmatprep.subr.mxu0 0.0
      %448 = vmatpush1.msra.mxu0 0.0
      %449 = vmatprep.subr.mxu0 0.0
      %450 = vmatpush1.msra.mxu0 0.0
      %451 = vmatprep.subr.mxu0 0.0
      %452 = vmatpush1.msra.mxu0 0.0
      %453 = vmatprep.subr.mxu0 0.0
      %454 = vmatpush1.msra.mxu0 0.0
      %455 = vmatprep.subr.mxu0 0.0
      %456 = vmatpush1.msra.mxu0 0.0
      %457 = vmatprep.subr.mxu0 0.0
      %458 = vmatpush1.msra.mxu0 0.0
      %459 = vmatprep.subr.mxu0 0.0
      %460 = vmatpush1.msra.mxu0 0.0
      %461 = vmatprep.subr.mxu0 0.0
      %462 = vmatpush1.msra.mxu0 0.0
      %463 = vmatprep.subr.mxu0 0.0
      %464 = vmatpush1.msra.mxu0 0.0
      %465 = vmatprep.subr.mxu0 0.0
      %466 = vmatpush1.msra.mxu0 0.0
      %467 = vmatprep.mubr.f32.mxu0 0.0
      %468 = vmatmul.mubr.f32.gmra.mrb[0].mxu0 %v401
      %v469 = vpop.f32.mrb[0].mxu0
      %v470 = vadd.f32 %v397, %v469
      %v471 = vpop.f32.mrb[0].mxu0
      %472 = vdwg.mxu0
      %v473 = vxor.u32 %v470, 2147483648
      %v474 = vmul.f32 %v473, 1.442695
      %v475 = vpow.pop %v474
      %v476 = vadd.f32 %v475, 1.0
      %v477 = vrcp.pop %v476
      %v478 = vmul.f32 1.0, %v477
      %v479 = vmul.f32 %v470, %v478
      %v480 = vld [vmem:[%s5] sm:$0xff]
      %v481 = vld [vmem:[%s5 + $0x8] sm:$0xff]
      %v482 = vld [vmem:[%s5 + $0x10] sm:$0xff]
      %v483 = vld [vmem:[%s5 + $0x18] sm:$0xff]
      %v484 = vld [vmem:[%s6] sm:$0x1]
      %v486 = vlaneseq
      %v487 = vshrl.u32 %v486, 7
      %v488 = vsub.s32 0, %v487
      %v489 = vrot.slane %v484, %v488
      %vm491 = vcmask 261120
      %v493 = vsel %vm491, %v479, 0
      %495 = vmatprep.subr.mxu0 0.0
      %496 = vmatpush1.msra.mxu0 %v480
      %497 = vmatprep.subr.mxu0 0.0
      %498 = vmatpush1.msra.mxu0 %v481
      %499 = vmatprep.subr.mxu0 0.0
      %500 = vmatpush1.msra.mxu0 %v482
      %501 = vmatprep.subr.mxu0 0.0
      %502 = vmatpush1.msra.mxu0 %v483
      %503 = vmatprep.subr.mxu0 0.0
      %504 = vmatpush1.msra.mxu0 0.0
      %505 = vmatprep.subr.mxu0 0.0
      %506 = vmatpush1.msra.mxu0 0.0
      %507 = vmatprep.subr.mxu0 0.0
      %508 = vmatpush1.msra.mxu0 0.0
      %509 = vmatprep.subr.mxu0 0.0
      %510 = vmatpush1.msra.mxu0 0.0
      %511 = vmatprep.subr.mxu0 0.0
      %512 = vmatpush1.msra.mxu0 0.0
      %513 = vmatprep.subr.mxu0 0.0
      %514 = vmatpush1.msra.mxu0 0.0
      %515 = vmatprep.subr.mxu0 0.0
      %516 = vmatpush1.msra.mxu0 0.0
      %517 = vmatprep.subr.mxu0 0.0
      %518 = vmatpush1.msra.mxu0 0.0
      %519 = vmatprep.subr.mxu0 0.0
      %520 = vmatpush1.msra.mxu0 0.0
      %521 = vmatprep.subr.mxu0 0.0
      %522 = vmatpush1.msra.mxu0 0.0
      %523 = vmatprep.subr.mxu0 0.0
      %524 = vmatpush1.msra.mxu0 0.0
      %525 = vmatprep.subr.mxu0 0.0
      %526 = vmatpush1.msra.mxu0 0.0
      %527 = vmatprep.subr.mxu0 0.0
      %528 = vmatpush1.msra.mxu0 0.0
      %529 = vmatprep.subr.mxu0 0.0
      %530 = vmatpush1.msra.mxu0 0.0
      %531 = vmatprep.subr.mxu0 0.0
      %532 = vmatpush1.msra.mxu0 0.0
      %533 = vmatprep.subr.mxu0 0.0
      %534 = vmatpush1.msra.mxu0 0.0
      %535 = vmatprep.subr.mxu0 0.0
      %536 = vmatpush1.msra.mxu0 0.0
      %537 = vmatprep.subr.mxu0 0.0
      %538 = vmatpush1.msra.mxu0 0.0
      %539 = vmatprep.subr.mxu0 0.0
      %540 = vmatpush1.msra.mxu0 0.0
      %541 = vmatprep.subr.mxu0 0.0
      %542 = vmatpush1.msra.mxu0 0.0
      %543 = vmatprep.subr.mxu0 0.0
      %544 = vmatpush1.msra.mxu0 0.0
      %545 = vmatprep.subr.mxu0 0.0
      %546 = vmatpush1.msra.mxu0 0.0
      %547 = vmatprep.subr.mxu0 0.0
      %548 = vmatpush1.msra.mxu0 0.0
      %549 = vmatprep.subr.mxu0 0.0
      %550 = vmatpush1.msra.mxu0 0.0
      %551 = vmatprep.subr.mxu0 0.0
      %552 = vmatpush1.msra.mxu0 0.0
      %553 = vmatprep.subr.mxu0 0.0
      %554 = vmatpush1.msra.mxu0 0.0
      %555 = vmatprep.subr.mxu0 0.0
      %556 = vmatpush1.msra.mxu0 0.0
      %557 = vmatprep.subr.mxu0 0.0
      %558 = vmatpush1.msra.mxu0 0.0
      %559 = vmatprep.mubr.f32.mxu0 0.0
      %560 = vmatmul.mubr.f32.gmra.mrb[0].mxu0 %v493
      %v561 = vpop.f32.mrb[0].mxu0
      %v562 = vadd.f32 %v489, %v561
      %v563 = vpop.f32.mrb[0].mxu0
      %564 = vdwg.mxu0
      %v565 = vxor.u32 %v562, 2147483648
      %v566 = vmul.f32 %v565, 1.442695
      %v567 = vpow.pop %v566
      %v568 = vadd.f32 %v567, 1.0
      %v569 = vrcp.pop %v568
      %v570 = vmul.f32 1.0, %v569
      %v571 = vmul.f32 %v562, %v570
      %vm572 = vcmask 31744
      %573 = vst.msk [vmem:[%s290] sm:$0xff] %vm572, %v571
      %p574 = scmp.lt.s32.totalorder %s18, 1
      %s575 = scalar_select %p574, %s18, 1
      %s576 = smul.addr %s575, 8
      %s577 = scalar_lea.vmem %s7, %s576
      // Predicated region
      $region49: #{tpu_custom_call.1} parent=47 // pred_check
        %p578 = pneg %p193
      $region50: #{tpu_custom_call.1} parent=47 // pred_check_branch
        %580 = sbr.rel (%p578) target = $region52
      $region51: #{tpu_custom_call.1} parent=47 // pred_region
        _
      $region52: #{tpu_custom_call.1} parent=47 // pred_fallthru
        _
    $region48: #{tpu_custom_call.1} parent=5 // pred_fallthru
      _
    %p581 = scmp.le.s32.totalorder 2, %s13
    // Predicated region
    $region53: #{tpu_custom_call.1} parent=5 // pred_check
      %p582 = pneg %p581
    $region54: #{tpu_custom_call.1} parent=5 // pred_check_branch
      %584 = sbr.rel (%p582) target = $region56
    $region55: #{tpu_custom_call.1} parent=5 // pred_region
      %s585 = ssub.s32 %s13, 2
      // Predicated region
      $region57: #{tpu_custom_call.1} parent=55 // pred_check
        %p586 = pneg %p199
      $region58: #{tpu_custom_call.1} parent=55 // pred_check_branch
        %588 = sbr.rel (%p586) target = $region60
      $region59: #{tpu_custom_call.1} parent=55 // pred_region
        %p589 = scmp.lt.s32.totalorder %s19, 1
        %s590 = scalar_select %p589, %s19, 1
        %s591 = smul.addr %s590, 8
        %s592 = scalar_lea.vmem %s7, %s591
      $region60: #{tpu_custom_call.1} parent=55 // pred_fallthru
        _
    $region56: #{tpu_custom_call.1} parent=5 // pred_fallthru
      _
  $region6: #{tpu_custom_call.1} parent=0 // loop_footer
    %s17 = sadd.s32 1, %s13
  $region7: #{tpu_custom_call.1} parent=0 // loop_footer_branch
    %12 = sbr.rel target = $region3
  $region8: #{tpu_custom_call.1} parent=0 // loop_exit
    _

</llo_original>
